<compile_context>
chip_gen: v5e
topology: v5e:2x2
jax: 0.10.0
libtpu: 0.0.40
codegen_flags: <defaults>
</compile_context>

<pallas_src>
import math
import numpy as np
import jax
import jax.numpy as jnp
from jax import lax
from jax.experimental import pallas as pl
from jax.experimental.pallas import tpu as pltpu  # noqa: F401  (TPU backend import)


# ---------------- host-side parameter construction (glue) ----------------
def _hz_to_erb(hz):
    return hz / 9.26449 + 24.7


def design_gammatone_fir(freq, samplerate, order=4, numtaps=32, band_width_factor=1.0):
    """Port of design_gammatone(..., ftype='fir') from the PyTorch module."""
    freq = float(freq)
    samplerate = float(samplerate)
    assert 0 < freq < samplerate / 2
    t = np.arange(numtaps) / samplerate
    bw = 1.019 * _hz_to_erb(freq) * band_width_factor
    b = t ** (order - 1) * np.exp(-2 * np.pi * bw * t)
    b = b * np.cos(2 * np.pi * freq * t)
    scale = 2 * (2 * np.pi * bw) ** order
    scale /= float(math.factorial(order - 1))   # float_factorial(order - 1)
    scale /= samplerate
    return (b * scale).astype(np.float32)


def _round_up(v, m):
    return ((v + m - 1) // m) * m


def flipped_conv_matrix_np(h, n_in, m_out):
    """W (n_in, m_out) such that x @ W == full_conv(flip(x), h), right-zero-padded.

    The signal flip is baked into the (reversed) Toeplitz rows:
        (x @ W)[m] = sum_n x[n] * h[m - (n_in - 1 - n)].
    Host-side numpy; used only for the static (non-trainable) normal gammatone.
    """
    h = np.asarray(h, np.float64)
    L = h.shape[0]
    n = np.arange(n_in)[:, None]
    m = np.arange(m_out)[None, :]
    idx = m - (n_in - 1 - n)
    valid = (idx >= 0) & (idx < L)
    return np.where(valid, h[np.clip(idx, 0, L - 1)], 0.0).astype(np.float32)


# ---------------- Pallas kernel (hot path) ----------------
def hearing_kernel(x_ref, w_ref, o_ref):
    # One fused MXU matmul: (RPAD, N)bf16 @ (N, 2*MPAD)bf16 -> (RPAD, 2*MPAD)f32.
    # bf16 operands halve the dominant W DMA traffic / VMEM footprint; accumulation
    # stays f32 via preferred_element_type.
    o_ref[...] = jnp.dot(x_ref[...], w_ref[...], preferred_element_type=jnp.float32)


def make_my_model_v2_forward(g_norm, N, B, C, gamma_numtaps, fir_numtaps):
    """Build the jitted forward with all static (non-trainable) pieces precomputed.

    Returns forward(x, g_imp, fir_taps) -> (out_NH, out_HI), each (B, C, M2).
    """
    Tg = int(gamma_numtaps)
    Tf = int(fir_numtaps)
    Lc = Tg + Tf - 1                      # combined (g_imp * fir) filter length
    M2 = N + Lc - 1                       # final output length of both branches
    R = B * C
    RPAD = _round_up(max(R, 8), 8)        # sublane-aligned rows
    MPAD = _round_up(M2, 128)             # lane-dense output columns per branch

    # Static normal-branch Toeplitz, built ONCE host-side.  Its zero columns at
    # m >= N + Tg - 1 implement the F.pad of the NH branch.
    w_norm_bf16 = jnp.asarray(flipped_conv_matrix_np(g_norm, N, MPAD), jnp.bfloat16)

    # Constant Hankel index for the FIR-dependent impaired branch:
    #   W_comb[n, m] = h_ext[n + m],  with h_comb placed at offset N-1 in h_ext.
    hankel_idx = jnp.asarray(np.arange(N)[:, None] + np.arange(MPAD)[None, :], jnp.int32)

    # Single kernel invocation, whole operands resident in VMEM (xp 2 KiB,
    # W 128 KiB bf16, out 16 KiB at these shapes -> far below every generation's
    # default scoped-VMEM limit).  No grid: avoids per-step overhead on 1-TC parts.
    hearing_call = pl.pallas_call(
        hearing_kernel,
        out_shape=jax.ShapeDtypeStruct((RPAD, 2 * MPAD), jnp.float32),
    )

    @jax.jit
    def forward(x, g_imp, fir_taps):
        # Fold the trainable hearing-aid FIR into the impaired gammatone filter
        # (associativity of linear convolution).  Tiny 47-tap op, done in f32.
        h_comb = jnp.convolve(g_imp.astype(jnp.float32), fir_taps.astype(jnp.float32),
                              mode="full", precision=lax.Precision.HIGHEST)

        # Impaired-branch banded Toeplitz (flip baked in) from the 47-wide band:
        # place taps in a padded vector, then one constant-index Hankel gather.
        h_ext = jnp.zeros((N - 1 + MPAD,), jnp.float32).at[N - 1:N - 1 + Lc].set(h_comb)
        w_comb_bf16 = h_ext[hankel_idx].astype(jnp.bfloat16)            # (N, MPAD)
        w_all = jnp.concatenate([w_norm_bf16, w_comb_bf16], axis=1)     # (N, 2*MPAD)

        # Row-pad the (unflipped) signal to a sublane multiple, bf16 operands.
        xp = jnp.zeros((RPAD, N), jnp.bfloat16).at[:R].set(
            x.reshape(R, N).astype(jnp.bfloat16))

        out = hearing_call(xp, w_all)                                   # (RPAD, 2*MPAD) f32

        out_nh = out[:R, :M2].reshape(B, C, M2)
        out_hi = out[:R, MPAD:MPAD + M2].reshape(B, C, M2)
        return out_nh, out_hi

    return forward


if __name__ == "__main__":
    # Module hyper-parameters (small, consistent with the forward pass; C=1 as
    # implied by the 1-channel conv inside GammatoneFilter / fft_conv usage).
    B, C, N = 2, 1, 128
    samplerate = 16000.0
    center_frequencies = [500.0, 1000.0, 2000.0, 4000.0]
    gamma_numtaps = 32
    fir_numtaps = 16
    band_width_factor = 5.0

    # Non-trainable gammatone filterbanks; HearingModel averages the K filter
    # outputs, which by linearity equals convolving once with the averaged filter.
    b_norm = np.stack([design_gammatone_fir(fc, samplerate, 4, gamma_numtaps, 1.0)
                       for fc in center_frequencies])
    b_imp = np.stack([design_gammatone_fir(fc, samplerate, 4, gamma_numtaps, band_width_factor)
                      for fc in center_frequencies])
    g_norm = b_norm.mean(axis=0).astype(np.float32)          # stays host-side (static)
    g_imp = jnp.asarray(b_imp.mean(axis=0), jnp.float32)

    # Deterministic inputs / trainable FIR taps (torch.randn(num_taps,1).view(-1) equiv.)
    key = jax.random.PRNGKey(0)
    k_x, k_fir = jax.random.split(key)
    x = jax.random.normal(k_x, (B, C, N), dtype=jnp.float32)
    fir_taps = jax.random.normal(k_fir, (fir_numtaps,), dtype=jnp.float32)

    forward = make_my_model_v2_forward(g_norm, N, B, C, gamma_numtaps, fir_numtaps)
    out_nh, out_hi = jax.block_until_ready(forward(x, g_imp, fir_taps))

    # ---- sanity check vs a float64 direct-convolution reference of the module math ----
    xf_np = np.flip(np.asarray(x, np.float64), axis=-1).reshape(B * C, N)
    gn = np.asarray(g_norm, np.float64)
    gi = np.asarray(g_imp, np.float64)
    fr = np.asarray(fir_taps, np.float64)
    ref_nh = np.stack([np.convolve(r, gn) for r in xf_np])
    ref_nh = np.pad(ref_nh, ((0, 0), (0, fir_numtaps - 1)))
    ref_imp = np.stack([np.convolve(r, gi) for r in xf_np])
    ref_hi = np.stack([np.convolve(r, fr) for r in ref_imp])

    def _check(name, got, ref):
        # bf16 operands / f32 accumulation -> tolerance scaled to output magnitude.
        got = np.asarray(got).reshape(ref.shape)
        err = float(np.max(np.abs(got - ref)))
        scale = float(max(np.max(np.abs(ref)), 1e-6))
        assert err <= 3e-2 * scale + 1e-5, f"{name}: max err {err:.3e} vs scale {scale:.3e}"

    _check("out_NH", out_nh, ref_nh)
    _check("out_HI", out_hi, ref_hi)

    print("KERNEL_OK")
</pallas_src>

<mosaic_0001>
module attributes {stable_mosaic.version = 11 : i64} {
  func.func @hearing_kernel(%arg0: memref<8x128xbf16, #tpu.memory_space<vmem>>, %arg1: memref<128x512xbf16, #tpu.memory_space<vmem>>, %arg2: memref<8x512xf32, #tpu.memory_space<vmem>>) attributes {dimension_semantics = [], scalar_prefetch = 0 : i64, scratch_operands = 0 : i64, tpu.core_type = #tpu.core_type<tc>} {
    %c0 = arith.constant 0 : index
    %c0_0 = arith.constant 0 : index
    %0 = vector.load %arg0[%c0, %c0_0] : memref<8x128xbf16, #tpu.memory_space<vmem>>, vector<8x128xbf16>
    %c0_1 = arith.constant 0 : index
    %c0_2 = arith.constant 0 : index
    %1 = vector.load %arg1[%c0_1, %c0_2] : memref<128x512xbf16, #tpu.memory_space<vmem>>, vector<128x512xbf16>
    %cst = arith.constant dense<0.000000e+00> : vector<8x512xf32>
    %2 = tpu.matmul %0, %1, %cst {dimension_numbers = #tpu.dot_dimension_numbers<[1], [0], [0], [1], [0, 0, 1, 1], [], []>} : vector<8x128xbf16>, vector<128x512xbf16>, vector<8x512xf32> -> vector<8x512xf32>
    %c0_3 = arith.constant 0 : index
    %c0_4 = arith.constant 0 : index
    %3 = vector.load %arg2[%c0_3, %c0_4] : memref<8x512xf32, #tpu.memory_space<vmem>>, vector<8x512xf32>
    tpu.vector_store %arg2[%c0_3, %c0_4], %2 {strides = array<i32>} : memref<8x512xf32, #tpu.memory_space<vmem>>, vector<8x512xf32>,
    return
  }
}

</mosaic_0001>

<llo_original>
// kernel: forward.1
$region0: #{forward.1}
  #allocation0 [shape = 'u32[]', space=smem, size = 0x4, offset = 0x4, fixed_abs, tag = 'smem constant byte address 0x4 - core index']
  #allocation1 [shape = 'u32[72,128]{1,0:T(1,128)}', space=vmem, size = 0x9000, scoped, tag = 'internal scratch']
  %s0 = inlined_call_operand.vmem [shape: bf16[8,128], index: 0, kind: input, shape index: {}]
  %s1 = inlined_call_operand.vmem [shape: bf16[128,512], index: 1, kind: input, shape index: {}]
  %s2 = inlined_call_operand.vmem [shape: f32[8,512], index: 2, kind: output, shape index: {}]
  %s3 = sld [smem:[#allocation0]]
  $region18: #{forward.1} parent=0
    _
  %s5 = ssub.s32 1, %s3
  %s6 = scalar_select 0, %s5, %s3
  // Predicated region
  $region2: #{forward.1} parent=0 // pred_check
    _
  $region3: #{forward.1} parent=0 // pred_check_branch
    %8 = sbr.rel (0) target = $region5
  $region4: #{forward.1} parent=0 // pred_region
    _
  $region5: #{forward.1} parent=0 // pred_fallthru
    _
  // Predicated region
  $region6: #{forward.1} parent=0 // pred_check
    _
  $region7: #{forward.1} parent=0 // pred_check_branch
    %10 = sbr.rel (0) target = $region9
  $region8: #{forward.1} parent=0 // pred_region
    _
  $region9: #{forward.1} parent=0 // pred_fallthru
    _
  %v11 = vld [vmem:[%s0] sm:$0xf]
  %v12 = vld [vmem:[%s1] sm:$0xff]
  %v13 = vld [vmem:[%s1 + $0x8] sm:$0xff]
  %v14 = vld [vmem:[%s1 + $0x10] sm:$0xff]
  %v15 = vld [vmem:[%s1 + $0x18] sm:$0xff]
  %v16 = vld [vmem:[%s1 + $0x20] sm:$0xff]
  %v17 = vld [vmem:[%s1 + $0x28] sm:$0xff]
  %v18 = vld [vmem:[%s1 + $0x30] sm:$0xff]
  %v19 = vld [vmem:[%s1 + $0x38] sm:$0xff]
  %v20 = vld [vmem:[%s1 + $0x40] sm:$0xff]
  %v21 = vld [vmem:[%s1 + $0x48] sm:$0xff]
  %v22 = vld [vmem:[%s1 + $0x50] sm:$0xff]
  %v23 = vld [vmem:[%s1 + $0x58] sm:$0xff]
  %v24 = vld [vmem:[%s1 + $0x60] sm:$0xff]
  %v25 = vld [vmem:[%s1 + $0x68] sm:$0xff]
  %v26 = vld [vmem:[%s1 + $0x70] sm:$0xff]
  %v27 = vld [vmem:[%s1 + $0x78] sm:$0xff]
  %v28 = vld [vmem:[%s1 + $0x80] sm:$0xff]
  %v29 = vld [vmem:[%s1 + $0x88] sm:$0xff]
  %v30 = vld [vmem:[%s1 + $0x90] sm:$0xff]
  %v31 = vld [vmem:[%s1 + $0x98] sm:$0xff]
  %v32 = vld [vmem:[%s1 + $0xa0] sm:$0xff]
  %v33 = vld [vmem:[%s1 + $0xa8] sm:$0xff]
  %v34 = vld [vmem:[%s1 + $0xb0] sm:$0xff]
  %v35 = vld [vmem:[%s1 + $0xb8] sm:$0xff]
  %v36 = vld [vmem:[%s1 + $0xc0] sm:$0xff]
  %v37 = vld [vmem:[%s1 + $0xc8] sm:$0xff]
  %v38 = vld [vmem:[%s1 + $0xd0] sm:$0xff]
  %v39 = vld [vmem:[%s1 + $0xd8] sm:$0xff]
  %v40 = vld [vmem:[%s1 + $0xe0] sm:$0xff]
  %v41 = vld [vmem:[%s1 + $0xe8] sm:$0xff]
  %v42 = vld [vmem:[%s1 + $0xf0] sm:$0xff]
  %v43 = vld [vmem:[%s1 + $0xf8] sm:$0xff]
  %v76 = vunpack.c.l.b16 %v12
  %v77 = vunpack.c.h.b16 %v12
  %v78 = vunpack.c.l.b16 %v13
  %v79 = vunpack.c.h.b16 %v13
  %v80 = vunpack.c.l.b16 %v14
  %v81 = vunpack.c.h.b16 %v14
  %v82 = vunpack.c.l.b16 %v15
  %v83 = vunpack.c.h.b16 %v15
  %v84 = vunpack.c.l.b16 %v16
  %v85 = vunpack.c.h.b16 %v16
  %v86 = vunpack.c.l.b16 %v17
  %v87 = vunpack.c.h.b16 %v17
  %v88 = vunpack.c.l.b16 %v18
  %v89 = vunpack.c.h.b16 %v18
  %v90 = vunpack.c.l.b16 %v19
  %v91 = vunpack.c.h.b16 %v19
  %v92 = vunpack.c.l.b16 %v20
  %v93 = vunpack.c.h.b16 %v20
  %v94 = vunpack.c.l.b16 %v21
  %v95 = vunpack.c.h.b16 %v21
  %v96 = vunpack.c.l.b16 %v22
  %v97 = vunpack.c.h.b16 %v22
  %v98 = vunpack.c.l.b16 %v23
  %v99 = vunpack.c.h.b16 %v23
  %v100 = vunpack.c.l.b16 %v24
  %v101 = vunpack.c.h.b16 %v24
  %v102 = vunpack.c.l.b16 %v25
  %v103 = vunpack.c.h.b16 %v25
  %v104 = vunpack.c.l.b16 %v26
  %v105 = vunpack.c.h.b16 %v26
  %v106 = vunpack.c.l.b16 %v27
  %v107 = vunpack.c.h.b16 %v27
  %v108 = vunpack.c.l.b16 %v28
  %v109 = vunpack.c.h.b16 %v28
  %v110 = vunpack.c.l.b16 %v29
  %v111 = vunpack.c.h.b16 %v29
  %v112 = vunpack.c.l.b16 %v30
  %v113 = vunpack.c.h.b16 %v30
  %v114 = vunpack.c.l.b16 %v31
  %v115 = vunpack.c.h.b16 %v31
  %v116 = vunpack.c.l.b16 %v32
  %v117 = vunpack.c.h.b16 %v32
  %v118 = vunpack.c.l.b16 %v33
  %v119 = vunpack.c.h.b16 %v33
  %v120 = vunpack.c.l.b16 %v34
  %v121 = vunpack.c.h.b16 %v34
  %v122 = vunpack.c.l.b16 %v35
  %v123 = vunpack.c.h.b16 %v35
  %v124 = vunpack.c.l.b16 %v36
  %v125 = vunpack.c.h.b16 %v36
  %v126 = vunpack.c.l.b16 %v37
  %v127 = vunpack.c.h.b16 %v37
  %v128 = vunpack.c.l.b16 %v38
  %v129 = vunpack.c.h.b16 %v38
  %v130 = vunpack.c.l.b16 %v39
  %v131 = vunpack.c.h.b16 %v39
  %v132 = vunpack.c.l.b16 %v40
  %v133 = vunpack.c.h.b16 %v40
  %v134 = vunpack.c.l.b16 %v41
  %v135 = vunpack.c.h.b16 %v41
  %v136 = vunpack.c.l.b16 %v42
  %v137 = vunpack.c.h.b16 %v42
  %v138 = vunpack.c.l.b16 %v43
  %v139 = vunpack.c.h.b16 %v43
  %v140 = vpack.c.b16 %v80, %v76
  %v141 = vpack.c.b16 %v81, %v77
  %v142 = vpack.c.b16 %v82, %v78
  %v143 = vpack.c.b16 %v83, %v79
  %v144 = vpack.c.b16 %v88, %v84
  %v145 = vpack.c.b16 %v89, %v85
  %v146 = vpack.c.b16 %v90, %v86
  %v147 = vpack.c.b16 %v91, %v87
  %v148 = vpack.c.b16 %v96, %v92
  %v149 = vpack.c.b16 %v97, %v93
  %v150 = vpack.c.b16 %v98, %v94
  %v151 = vpack.c.b16 %v99, %v95
  %v152 = vpack.c.b16 %v104, %v100
  %v153 = vpack.c.b16 %v105, %v101
  %v154 = vpack.c.b16 %v106, %v102
  %v155 = vpack.c.b16 %v107, %v103
  %v156 = vpack.c.b16 %v112, %v108
  %v157 = vpack.c.b16 %v113, %v109
  %v158 = vpack.c.b16 %v114, %v110
  %v159 = vpack.c.b16 %v115, %v111
  %v160 = vpack.c.b16 %v120, %v116
  %v161 = vpack.c.b16 %v121, %v117
  %v162 = vpack.c.b16 %v122, %v118
  %v163 = vpack.c.b16 %v123, %v119
  %v164 = vpack.c.b16 %v128, %v124
  %v165 = vpack.c.b16 %v129, %v125
  %v166 = vpack.c.b16 %v130, %v126
  %v167 = vpack.c.b16 %v131, %v127
  %v168 = vpack.c.b16 %v136, %v132
  %v169 = vpack.c.b16 %v137, %v133
  %v170 = vpack.c.b16 %v138, %v134
  %v171 = vpack.c.b16 %v139, %v135
  %204 = vmatpush.bf16.msra.mxu0 %v168
  %205 = vmatpush.bf16.msra.mxu0 %v164
  %206 = vmatpush.bf16.msra.mxu0 %v160
  %207 = vmatpush.bf16.msra.mxu0 %v156
  %208 = vmatpush.bf16.msra.mxu0 %v152
  %209 = vmatpush.bf16.msra.mxu0 %v148
  %210 = vmatpush.bf16.msra.mxu0 %v144
  %211 = vmatpush.bf16.msra.mxu0 %v140
  %212 = vmatmul.bf16.gmra.mxu0 %v11
  %v213 = vpop.f32.mrf.mxu0
  %v214 = vadd.f32 0.0, %v213
  %v215 = vpop.f32.mrf.mxu0
  %216 = vdwg.mxu0
  %217 = vmatpush.bf16.msra.mxu0 %v169
  %218 = vmatpush.bf16.msra.mxu0 %v165
  %219 = vmatpush.bf16.msra.mxu0 %v161
  %220 = vmatpush.bf16.msra.mxu0 %v157
  %221 = vmatpush.bf16.msra.mxu0 %v153
  %222 = vmatpush.bf16.msra.mxu0 %v149
  %223 = vmatpush.bf16.msra.mxu0 %v145
  %224 = vmatpush.bf16.msra.mxu0 %v141
  %225 = vmatmul.bf16.gmra.mxu0 %v11
  %v226 = vpop.f32.mrf.mxu0
  %v227 = vadd.f32 0.0, %v226
  %v228 = vpop.f32.mrf.mxu0
  %229 = vdwg.mxu0
  %230 = vmatpush.bf16.msra.mxu0 %v170
  %231 = vmatpush.bf16.msra.mxu0 %v166
  %232 = vmatpush.bf16.msra.mxu0 %v162
  %233 = vmatpush.bf16.msra.mxu0 %v158
  %234 = vmatpush.bf16.msra.mxu0 %v154
  %235 = vmatpush.bf16.msra.mxu0 %v150
  %236 = vmatpush.bf16.msra.mxu0 %v146
  %237 = vmatpush.bf16.msra.mxu0 %v142
  %238 = vmatmul.bf16.gmra.mxu0 %v11
  %v239 = vpop.f32.mrf.mxu0
  %v240 = vadd.f32 0.0, %v239
  %v241 = vpop.f32.mrf.mxu0
  %242 = vdwg.mxu0
  %243 = vmatpush.bf16.msra.mxu0 %v171
  %244 = vmatpush.bf16.msra.mxu0 %v167
  %245 = vmatpush.bf16.msra.mxu0 %v163
  %246 = vmatpush.bf16.msra.mxu0 %v159
  %247 = vmatpush.bf16.msra.mxu0 %v155
  %248 = vmatpush.bf16.msra.mxu0 %v151
  %249 = vmatpush.bf16.msra.mxu0 %v147
  %250 = vmatpush.bf16.msra.mxu0 %v143
  %251 = vmatmul.bf16.gmra.mxu0 %v11
  %v252 = vpop.f32.mrf.mxu0
  %v253 = vadd.f32 0.0, %v252
  %v254 = vpop.f32.mrf.mxu0
  %255 = vdwg.mxu0
  %256 = vst [vmem:[%s2] sm:$0xff] %v214
  %257 = vst [vmem:[%s2 + $0x8] sm:$0xff] %v227
  %258 = vst [vmem:[%s2 + $0x10] sm:$0xff] %v240
  %259 = vst [vmem:[%s2 + $0x18] sm:$0xff] %v253
  // Predicated region
  $region10: #{forward.1} parent=0 // pred_check
    _
  $region11: #{forward.1} parent=0 // pred_check_branch
    %261 = sbr.rel (0) target = $region13
  $region12: #{forward.1} parent=0 // pred_region
    _
  $region13: #{forward.1} parent=0 // pred_fallthru
    _
  // Predicated region
  $region14: #{forward.1} parent=0 // pred_check
    _
  $region15: #{forward.1} parent=0 // pred_check_branch
    %263 = sbr.rel (0) target = $region17
  $region16: #{forward.1} parent=0 // pred_region
    _
  $region17: #{forward.1} parent=0 // pred_fallthru
    _

</llo_original>
